<compile_context>
chip_gen: v7x
topology: tpu7x:2x2x1
jax: 0.10.0
libtpu: 0.0.40
codegen_flags: <defaults>
</compile_context>

<pallas_src>
import functools

import jax
import jax.numpy as jnp
from jax import lax
from jax.experimental import pallas as pl
from jax.experimental.pallas import tpu as pltpu


def _round_up(n, m):
    return ((n + m - 1) // m) * m


def dqn_mlp_kernel(x_ref, w1_ref, b1_ref, w2_ref, b2_ref, w3_ref, b3_ref,
                   o_ref, *, sub):
    # Weights/biases are tiny (~75 KiB total) and stay VMEM-resident across the
    # whole grid (constant block index -> no re-DMA).
    w1 = w1_ref[...]
    b1 = b1_ref[...]
    w2 = w2_ref[...]
    b2 = b2_ref[...]
    w3 = w3_ref[...]
    b3 = b3_ref[...]

    n_sub = x_ref.shape[0] // sub  # static trip count

    def body(s, carry):
        r = pl.multiple_of(s * sub, sub)
        # fc1 + relu : bf16 MXU inputs, f32 accumulate / bias / ReLU on the VPU
        xb = x_ref[pl.ds(r, sub), :].astype(jnp.bfloat16)
        h1 = jnp.dot(xb, w1, preferred_element_type=jnp.float32)
        h1 = jnp.maximum(h1 + b1, 0.0)
        # fc2 + relu
        h2 = jnp.dot(h1.astype(jnp.bfloat16), w2,
                     preferred_element_type=jnp.float32)
        h2 = jnp.maximum(h2 + b2, 0.0)
        # fc3 (narrow N; stored unpadded)
        out = jnp.dot(h2.astype(jnp.bfloat16), w3,
                      preferred_element_type=jnp.float32)
        o_ref[pl.ds(r, sub), :] = (out + b3).astype(o_ref.dtype)
        return carry

    lax.fori_loop(0, n_sub, body, 0, unroll=True)


def dqn_forward(x, params, *, block_batch=1024, sub_batch=256):
    """Fused DQN MLP forward (one Pallas kernel, three layers fused).

    block_batch: rows streamed per grid step (large tiles amortize the ~0.35us
    per-step overhead; VMEM footprint stays tiny for this model).
    sub_batch: rows per in-kernel MXU pass (128 recommended on v5e to avoid
    spill traffic on its single vector-store slot; 256 is fine on v6e/v7x)."""
    w1, b1, w2, b2, w3, b3 = params
    batch, state_size = x.shape
    h1_dim = w1.shape[1]
    h2_dim = w2.shape[1]
    out_dim = w3.shape[1]

    # --- tiling: weights pinned in VMEM, f32 activations stream unpadded ---
    sub = min(sub_batch, _round_up(batch, 8))
    bb = max(sub, (block_batch // sub) * sub)          # tile is a multiple of sub
    tb = min(bb, _round_up(batch, sub))
    if batch > sub and tb >= batch:
        # keep >= 2 grid steps for larger batches so dimension_semantics
        # ("parallel",) can actually shard steps across both TCs on v7x
        tb = max(sub, _round_up(-(-batch // 2), sub))
    num_tiles = pl.cdiv(batch, tb)

    flops = 2 * batch * (state_size * h1_dim + h1_dim * h2_dim + h2_dim * out_dim)
    param_bytes = sum(int(p.size) * p.dtype.itemsize for p in params)
    bytes_accessed = (int(x.size) * x.dtype.itemsize    # f32 x read
                      + batch * out_dim * 4             # f32 out written
                      + param_bytes)                    # bf16 weights / f32 biases

    out = pl.pallas_call(
        functools.partial(dqn_mlp_kernel, sub=sub),
        out_shape=jax.ShapeDtypeStruct((batch, out_dim), jnp.float32),
        grid_spec=pltpu.PrefetchScalarGridSpec(
            num_scalar_prefetch=0,
            grid=(num_tiles,),
            in_specs=[
                pl.BlockSpec((tb, state_size), lambda i: (i, 0)),  # x tile streams
                pl.BlockSpec(w1.shape, lambda i: (0, 0)),          # weights stay put
                pl.BlockSpec(b1.shape, lambda i: (0, 0)),
                pl.BlockSpec(w2.shape, lambda i: (0, 0)),
                pl.BlockSpec(b2.shape, lambda i: (0, 0)),
                pl.BlockSpec(w3.shape, lambda i: (0, 0)),
                pl.BlockSpec(b3.shape, lambda i: (0, 0)),
            ],
            out_specs=pl.BlockSpec((tb, out_dim), lambda i: (i, 0)),
        ),
        compiler_params=pltpu.CompilerParams(
            # batch tiles are independent -> shard across both TCs on v7x
            dimension_semantics=("parallel",),
        ),
        cost_estimate=pl.CostEstimate(
            flops=flops, transcendentals=0, bytes_accessed=bytes_accessed),
    )(x, w1, b1, w2, b2, w3, b3)

    return out


def init_dqn_params(key, state_size, action_size, max_targets, hidden=128):
    """Deterministic init mimicking nn.Linear's U(-1/sqrt(fan_in), 1/sqrt(fan_in)).

    Weights are stored in bf16 (MXU-native); biases stay f32."""
    out_dim = action_size + max_targets
    dims = [(state_size, hidden), (hidden, hidden), (hidden, out_dim)]
    params = []
    for fan_in, fan_out in dims:
        key, kw, kb = jax.random.split(key, 3)
        bound = 1.0 / (fan_in ** 0.5)
        w = jax.random.uniform(kw, (fan_in, fan_out), jnp.float32, -bound, bound)
        b = jax.random.uniform(kb, (1, fan_out), jnp.float32, -bound, bound)
        params += [w.astype(jnp.bfloat16), b]
    return tuple(params)


def dqn_reference(x, params):
    """Pure-JAX reference matching the kernel's bf16-weight / f32-accumulate math."""
    w1, b1, w2, b2, w3, b3 = params
    f32 = jnp.float32
    h = x.astype(jnp.bfloat16).astype(f32)
    h = jnp.maximum(h @ w1.astype(f32) + b1, 0.0)
    h = h.astype(jnp.bfloat16).astype(f32)
    h = jnp.maximum(h @ w2.astype(f32) + b2, 0.0)
    h = h.astype(jnp.bfloat16).astype(f32)
    return h @ w3.astype(f32) + b3


if __name__ == "__main__":
    key = jax.random.PRNGKey(0)
    state_size = 32
    action_size = 4
    max_targets = 4
    out_dim = action_size + max_targets

    kx1, kx2, kp = jax.random.split(key, 3)
    params = init_dqn_params(kp, state_size, action_size, max_targets)

    # Small single-tile case: grid of 1, one 8-row sub-tile.
    x_small = jax.random.normal(kx1, (8, state_size), jnp.float32)
    out_small = jax.block_until_ready(dqn_forward(x_small, params))
    assert out_small.shape == (8, out_dim)
    assert jnp.allclose(out_small, dqn_reference(x_small, params),
                        atol=1e-3, rtol=1e-3)

    # Ragged batch: 520 rows -> tb=512, grid=2 (second block partial), two
    # 256-row inner MXU sub-tiles per grid step, weights VMEM-resident.
    x_big = jax.random.normal(kx2, (520, state_size), jnp.float32)
    out_big = jax.block_until_ready(dqn_forward(x_big, params))
    assert out_big.shape == (520, out_dim)
    assert jnp.allclose(out_big, dqn_reference(x_big, params),
                        atol=1e-3, rtol=1e-3)

    print("KERNEL_OK")
</pallas_src>

<mosaic_0001>
module attributes {stable_mosaic.version = 11 : i64} {
  func.func @dqn_mlp_kernel(%arg0: i32, %arg1: memref<8x32xf32, #tpu.memory_space<vmem>>, %arg2: memref<32x128xbf16, #tpu.memory_space<vmem>>, %arg3: memref<1x128xf32, #tpu.memory_space<vmem>>, %arg4: memref<128x128xbf16, #tpu.memory_space<vmem>>, %arg5: memref<1x128xf32, #tpu.memory_space<vmem>>, %arg6: memref<128x8xbf16, #tpu.memory_space<vmem>>, %arg7: memref<1x8xf32, #tpu.memory_space<vmem>>, %arg8: memref<8x8xf32, #tpu.memory_space<vmem>>) attributes {dimension_semantics = [#tpu.dimension_semantics<parallel>], iteration_bounds = array<i64: 1>, scalar_prefetch = 0 : i64, scratch_operands = 0 : i64, tpu.core_type = #tpu.core_type<tc>, window_params = [{transform_indices = @transform_0, window_bounds = array<i64: 8, 32>}, {pipeline_mode = #tpu.pipeline_mode<synchronous>, transform_indices = @transform_1, window_bounds = array<i64: 32, 128>}, {pipeline_mode = #tpu.pipeline_mode<synchronous>, transform_indices = @transform_2, window_bounds = array<i64: 1, 128>}, {pipeline_mode = #tpu.pipeline_mode<synchronous>, transform_indices = @transform_3, window_bounds = array<i64: 128, 128>}, {pipeline_mode = #tpu.pipeline_mode<synchronous>, transform_indices = @transform_4, window_bounds = array<i64: 1, 128>}, {pipeline_mode = #tpu.pipeline_mode<synchronous>, transform_indices = @transform_5, window_bounds = array<i64: 128, 8>}, {pipeline_mode = #tpu.pipeline_mode<synchronous>, transform_indices = @transform_6, window_bounds = array<i64: 1, 8>}, {transform_indices = @transform_7, window_bounds = array<i64: 8, 8>}]} {
    %c0 = arith.constant 0 : index
    %c0_0 = arith.constant 0 : index
    %0 = vector.load %arg2[%c0, %c0_0] : memref<32x128xbf16, #tpu.memory_space<vmem>>, vector<32x128xbf16>
    %c0_1 = arith.constant 0 : index
    %c0_2 = arith.constant 0 : index
    %1 = vector.load %arg3[%c0_1, %c0_2] : memref<1x128xf32, #tpu.memory_space<vmem>>, vector<1x128xf32>
    %c0_3 = arith.constant 0 : index
    %c0_4 = arith.constant 0 : index
    %2 = vector.load %arg4[%c0_3, %c0_4] : memref<128x128xbf16, #tpu.memory_space<vmem>>, vector<128x128xbf16>
    %c0_5 = arith.constant 0 : index
    %c0_6 = arith.constant 0 : index
    %3 = vector.load %arg5[%c0_5, %c0_6] : memref<1x128xf32, #tpu.memory_space<vmem>>, vector<1x128xf32>
    %c0_7 = arith.constant 0 : index
    %c0_8 = arith.constant 0 : index
    %4 = vector.load %arg6[%c0_7, %c0_8] : memref<128x8xbf16, #tpu.memory_space<vmem>>, vector<128x8xbf16>
    %c0_9 = arith.constant 0 : index
    %c0_10 = arith.constant 0 : index
    %5 = vector.load %arg7[%c0_9, %c0_10] : memref<1x8xf32, #tpu.memory_space<vmem>>, vector<1x8xf32>
    %c0_i32 = arith.constant 0 : i32
    %c8_i32 = arith.constant 8 : i32
    %6 = arith.muli %c0_i32, %c8_i32 : i32
    %7 = tpu.assume_multiple %6, 8 : i32
    %8 = arith.index_cast %7 : i32 to index
    %c0_11 = arith.constant 0 : index
    %9 = vector.load %arg1[%8, %c0_11] : memref<8x32xf32, #tpu.memory_space<vmem>>, vector<8x32xf32>
    %10 = arith.truncf %9 : vector<8x32xf32> to vector<8x32xbf16>
    %cst = arith.constant dense<0.000000e+00> : vector<8x128xf32>
    %11 = tpu.matmul %10, %0, %cst {dimension_numbers = #tpu.dot_dimension_numbers<[1], [0], [0], [1], [0, 0, 1, 1], [], []>} : vector<8x32xbf16>, vector<32x128xbf16>, vector<8x128xf32> -> vector<8x128xf32>
    %12 = vector.broadcast %1 : vector<1x128xf32> to vector<8x128xf32>
    %13 = arith.addf %11, %12 : vector<8x128xf32>
    %cst_12 = arith.constant 0.000000e+00 : f32
    %14 = vector.broadcast %cst_12 : f32 to vector<8x128xf32>
    %15 = arith.maximumf %13, %14 : vector<8x128xf32>
    %16 = arith.truncf %15 : vector<8x128xf32> to vector<8x128xbf16>
    %cst_13 = arith.constant dense<0.000000e+00> : vector<8x128xf32>
    %17 = tpu.matmul %16, %2, %cst_13 {dimension_numbers = #tpu.dot_dimension_numbers<[1], [0], [0], [1], [0, 0, 1, 1], [], []>} : vector<8x128xbf16>, vector<128x128xbf16>, vector<8x128xf32> -> vector<8x128xf32>
    %18 = vector.broadcast %3 : vector<1x128xf32> to vector<8x128xf32>
    %19 = arith.addf %17, %18 : vector<8x128xf32>
    %cst_14 = arith.constant 0.000000e+00 : f32
    %20 = vector.broadcast %cst_14 : f32 to vector<8x128xf32>
    %21 = arith.maximumf %19, %20 : vector<8x128xf32>
    %22 = arith.truncf %21 : vector<8x128xf32> to vector<8x128xbf16>
    %cst_15 = arith.constant dense<0.000000e+00> : vector<8x8xf32>
    %23 = tpu.matmul %22, %4, %cst_15 {dimension_numbers = #tpu.dot_dimension_numbers<[1], [0], [0], [1], [0, 0, 1, 1], [], []>} : vector<8x128xbf16>, vector<128x8xbf16>, vector<8x8xf32> -> vector<8x8xf32>
    %24 = vector.broadcast %5 : vector<1x8xf32> to vector<8x8xf32>
    %25 = arith.addf %23, %24 : vector<8x8xf32>
    %26 = arith.index_cast %7 : i32 to index
    %c0_16 = arith.constant 0 : index
    %27 = vector.load %arg8[%26, %c0_16] : memref<8x8xf32, #tpu.memory_space<vmem>>, vector<8x8xf32>
    tpu.vector_store %arg8[%26, %c0_16], %25 {strides = array<i32>} : memref<8x8xf32, #tpu.memory_space<vmem>>, vector<8x8xf32>,
    %c1_i32 = arith.constant 1 : i32
    return
  }
  func.func @transform_0(%arg0: i32) -> (i32, i32) {
    %c0_i32 = arith.constant 0 : i32
    %c0_i32_0 = arith.constant 0 : i32
    return %arg0, %c0_i32 : i32, i32
  }
  func.func @transform_1(%arg0: i32) -> (i32, i32) {
    %c0_i32 = arith.constant 0 : i32
    %c0_i32_0 = arith.constant 0 : i32
    %c0_i32_1 = arith.constant 0 : i32
    return %c0_i32, %c0_i32_0 : i32, i32
  }
  func.func @transform_2(%arg0: i32) -> (i32, i32) {
    %c0_i32 = arith.constant 0 : i32
    %c0_i32_0 = arith.constant 0 : i32
    %c0_i32_1 = arith.constant 0 : i32
    return %c0_i32, %c0_i32_0 : i32, i32
  }
  func.func @transform_3(%arg0: i32) -> (i32, i32) {
    %c0_i32 = arith.constant 0 : i32
    %c0_i32_0 = arith.constant 0 : i32
    %c0_i32_1 = arith.constant 0 : i32
    return %c0_i32, %c0_i32_0 : i32, i32
  }
  func.func @transform_4(%arg0: i32) -> (i32, i32) {
    %c0_i32 = arith.constant 0 : i32
    %c0_i32_0 = arith.constant 0 : i32
    %c0_i32_1 = arith.constant 0 : i32
    return %c0_i32, %c0_i32_0 : i32, i32
  }
  func.func @transform_5(%arg0: i32) -> (i32, i32) {
    %c0_i32 = arith.constant 0 : i32
    %c0_i32_0 = arith.constant 0 : i32
    %c0_i32_1 = arith.constant 0 : i32
    return %c0_i32, %c0_i32_0 : i32, i32
  }
  func.func @transform_6(%arg0: i32) -> (i32, i32) {
    %c0_i32 = arith.constant 0 : i32
    %c0_i32_0 = arith.constant 0 : i32
    %c0_i32_1 = arith.constant 0 : i32
    return %c0_i32, %c0_i32_0 : i32, i32
  }
  func.func @transform_7(%arg0: i32) -> (i32, i32) {
    %c0_i32 = arith.constant 0 : i32
    %c0_i32_0 = arith.constant 0 : i32
    return %arg0, %c0_i32 : i32, i32
  }
}

</mosaic_0001>

<llo_original>
// kernel: tpu_custom_call.1
$region0: #{tpu_custom_call.1}
  #allocation0 [shape = 'u32[]', space=smem, size = 0x4, offset = 0x4, fixed_abs, tag = 'smem constant byte address 0x4 - core index']
  #allocation1 [shape = 'u32[144,128]{1,0:T(1,128)}', space=vmem, size = 0x12000, scoped, tag = 'internal scratch']
  %s0 = inlined_call_operand.vmem [shape: f32[8,32], index: 0, kind: input, shape index: {}]
  %s1 = inlined_call_operand.hbm [shape: bf16[32,128], index: 1, kind: input, shape index: {}]
  %s2 = inlined_call_operand.vmem [shape: f32[1,128], index: 2, kind: input, shape index: {}]
  %s3 = inlined_call_operand.vmem [shape: bf16[128,128], index: 3, kind: input, shape index: {}]
  %s4 = inlined_call_operand.vmem [shape: f32[1,128], index: 4, kind: input, shape index: {}]
  %s5 = inlined_call_operand.vmem [shape: bf16[128,8], index: 5, kind: input, shape index: {}]
  %s6 = inlined_call_operand.vmem [shape: f32[1,8], index: 6, kind: input, shape index: {}]
  %s7 = inlined_call_operand.hbm [shape: f32[8,8], index: 7, kind: output, shape index: {}]
  %s8 = sld [smem:[#allocation0]]
  $region42: #{tpu_custom_call.1} parent=0
    _
  %s10 = ssub.s32 1, %s8
  %s11 = scalar_select 0, %s10, %s8
  $region1: #{tpu_custom_call.1} parent=0
    #allocation2 [shape = 'u8[8192]{0}', space=vmem, size = 0x2000, scoped, tag = 'input window, operand 1, single buffered']
    #allocation3 [shape = 's32[1]{0}', space=sflag, size = 0x4, scoped, tag = 'scoped memory for tpu_custom_call.1']
    #allocation4 [shape = 's32[1]{0}', space=sflag, size = 0x4, scoped, tag = 'scoped memory for tpu_custom_call.1']
    #allocation5 [shape = 'u8[4096]{0}', space=vmem, size = 0x1000, scoped, tag = 'output window, operand 0, single buffered']
    %12 = vsyncpa [#allocation3], 0
    %13 = vsyncpa [#allocation4], 0
    // Predicated region
    $region2: #{tpu_custom_call.1} parent=1 // pred_check
      _
    $region3: #{tpu_custom_call.1} parent=1 // pred_check_branch
      %15 = sbr.rel (0) target = $region5
    $region4: #{tpu_custom_call.1} parent=1 // pred_region
      _
    $region5: #{tpu_custom_call.1} parent=1 // pred_fallthru
      _
    // Predicated region
    $region6: #{tpu_custom_call.1} parent=1 // pred_check
      _
    $region7: #{tpu_custom_call.1} parent=1 // pred_check_branch
      %17 = sbr.rel (0) target = $region9
    $region8: #{tpu_custom_call.1} parent=1 // pred_region
      %s19 = ssub.s32 256, 256
      %20 = vsyncadd [#allocation3], %s19
      %s21 = sshll.u32 [#allocation2], 4
      %s22 = int_to_ptr.vmem [resolvable:$true] %s21
      %27 = dma.hbm_to_vmem [thread:$0]  %s1, 256, %s22, [#allocation3], 64, 64, 4
    $region9: #{tpu_custom_call.1} parent=1 // pred_fallthru
      _
    // Predicated region
    $region10: #{tpu_custom_call.1} parent=1 // pred_check
      _
    $region11: #{tpu_custom_call.1} parent=1 // pred_check_branch
      %29 = sbr.rel (0) target = $region13
    $region12: #{tpu_custom_call.1} parent=1 // pred_region
      _
    $region13: #{tpu_custom_call.1} parent=1 // pred_fallthru
      _
    // Predicated region
    $region14: #{tpu_custom_call.1} parent=1 // pred_check
      _
    $region15: #{tpu_custom_call.1} parent=1 // pred_check_branch
      %31 = sbr.rel (0) target = $region17
    $region16: #{tpu_custom_call.1} parent=1 // pred_region
      _
    $region17: #{tpu_custom_call.1} parent=1 // pred_fallthru
      _
    // Predicated region
    $region18: #{tpu_custom_call.1} parent=1 // pred_check
      _
    $region19: #{tpu_custom_call.1} parent=1 // pred_check_branch
      %33 = sbr.rel (0) target = $region21
    $region20: #{tpu_custom_call.1} parent=1 // pred_region
      _
    $region21: #{tpu_custom_call.1} parent=1 // pred_fallthru
      _
    // Predicated region
    $region22: #{tpu_custom_call.1} parent=1 // pred_check
      _
    $region23: #{tpu_custom_call.1} parent=1 // pred_check_branch
      %35 = sbr.rel (0) target = $region25
    $region24: #{tpu_custom_call.1} parent=1 // pred_region
      _
    $region25: #{tpu_custom_call.1} parent=1 // pred_fallthru
      _
    // Predicated region
    $region26: #{tpu_custom_call.1} parent=1 // pred_check
      _
    $region27: #{tpu_custom_call.1} parent=1 // pred_check_branch
      %37 = sbr.rel (0) target = $region29
    $region28: #{tpu_custom_call.1} parent=1 // pred_region
      _
    $region29: #{tpu_custom_call.1} parent=1 // pred_fallthru
      _
    // Predicated region
    $region30: #{tpu_custom_call.1} parent=1 // pred_check
      _
    $region31: #{tpu_custom_call.1} parent=1 // pred_check_branch
      %39 = sbr.rel (0) target = $region33
    $region32: #{tpu_custom_call.1} parent=1 // pred_region
      %40 = dma.done [#allocation3], 256
    $region33: #{tpu_custom_call.1} parent=1 // pred_fallthru
      _
    %v42 = vld [vmem:[#allocation2] sm:$0xf]
    %v43 = vld [vmem:[#allocation2 + $0x4] sm:$0xf]
    %v44 = vld [vmem:[#allocation2 + $0x8] sm:$0xf]
    %v45 = vld [vmem:[#allocation2 + $0xc] sm:$0xf]
    %v46 = vld [vmem:[%s2] sm:$0x1]
    %v47 = vld [vmem:[%s3] sm:$0xf]
    %v48 = vld [vmem:[%s3 + $0x4] sm:$0xf]
    %v49 = vld [vmem:[%s3 + $0x8] sm:$0xf]
    %v50 = vld [vmem:[%s3 + $0xc] sm:$0xf]
    %v51 = vld [vmem:[%s3 + $0x10] sm:$0xf]
    %v52 = vld [vmem:[%s3 + $0x14] sm:$0xf]
    %v53 = vld [vmem:[%s3 + $0x18] sm:$0xf]
    %v54 = vld [vmem:[%s3 + $0x1c] sm:$0xf]
    %v55 = vld [vmem:[%s3 + $0x20] sm:$0xf]
    %v56 = vld [vmem:[%s3 + $0x24] sm:$0xf]
    %v57 = vld [vmem:[%s3 + $0x28] sm:$0xf]
    %v58 = vld [vmem:[%s3 + $0x2c] sm:$0xf]
    %v59 = vld [vmem:[%s3 + $0x30] sm:$0xf]
    %v60 = vld [vmem:[%s3 + $0x34] sm:$0xf]
    %v61 = vld [vmem:[%s3 + $0x38] sm:$0xf]
    %v62 = vld [vmem:[%s3 + $0x3c] sm:$0xf]
    %v63 = vld [vmem:[%s4] sm:$0x1]
    %v64 = vld [vmem:[%s5] sm:$0xf]
    %v65 = vld [vmem:[%s5 + $0x4] sm:$0xf]
    %v66 = vld [vmem:[%s5 + $0x8] sm:$0xf]
    %v67 = vld [vmem:[%s5 + $0xc] sm:$0xf]
    %v68 = vld [vmem:[%s5 + $0x10] sm:$0xf]
    %v69 = vld [vmem:[%s5 + $0x14] sm:$0xf]
    %v70 = vld [vmem:[%s5 + $0x18] sm:$0xf]
    %v71 = vld [vmem:[%s5 + $0x1c] sm:$0xf]
    %v72 = vld [vmem:[%s5 + $0x20] sm:$0xf]
    %v73 = vld [vmem:[%s5 + $0x24] sm:$0xf]
    %v74 = vld [vmem:[%s5 + $0x28] sm:$0xf]
    %v75 = vld [vmem:[%s5 + $0x2c] sm:$0xf]
    %v76 = vld [vmem:[%s5 + $0x30] sm:$0xf]
    %v77 = vld [vmem:[%s5 + $0x34] sm:$0xf]
    %v78 = vld [vmem:[%s5 + $0x38] sm:$0xf]
    %v79 = vld [vmem:[%s5 + $0x3c] sm:$0xf]
    %v80 = vld [vmem:[%s6] sm:$0x1]
    %v81 = vld [vmem:[%s0] sm:$0xff]
    %v82 = vpack.c.bf16 %v81, %v81
    %v84 = vlaneseq
    %v85 = vshrl.u32 %v84, 7
    %v86 = vsub.s32 0, %v85
    %v87 = vrot.slane %v46, %v86
    %v93 = vunpack.c.l.b16 %v42
    %v94 = vunpack.c.l.b16 %v43
    %v95 = vunpack.c.l.b16 %v44
    %v96 = vunpack.c.l.b16 %v45
    %v97 = vpack.c.b16 %v94, %v93
    %v98 = vpack.c.b16 %v96, %v95
    %vm101 = vcmask 261120
    %v103 = vsel %vm101, %v82, 0
    %105 = vmatprep.subr.bf16.mxu0 0
    %106 = vmatpush1.bf16.msra.mxu0 %v97
    %107 = vmatprep.subr.bf16.mxu0 0
    %108 = vmatpush1.bf16.msra.mxu0 %v98
    %109 = vmatprep.subr.bf16.mxu0 0
    %110 = vmatpush1.bf16.msra.mxu0 0
    %111 = vmatprep.subr.bf16.mxu0 0
    %112 = vmatpush1.bf16.msra.mxu0 0
    %113 = vmatprep.subr.bf16.mxu0 0
    %114 = vmatpush1.bf16.msra.mxu0 0
    %115 = vmatprep.subr.bf16.mxu0 0
    %116 = vmatpush1.bf16.msra.mxu0 0
    %117 = vmatprep.subr.bf16.mxu0 0
    %118 = vmatpush1.bf16.msra.mxu0 0
    %119 = vmatprep.subr.bf16.mxu0 0
    %120 = vmatpush1.bf16.msra.mxu0 0
    %121 = vmatprep.subr.bf16.mxu0 0
    %122 = vmatpush1.bf16.msra.mxu0 0
    %123 = vmatprep.subr.bf16.mxu0 0
    %124 = vmatpush1.bf16.msra.mxu0 0
    %125 = vmatprep.subr.bf16.mxu0 0
    %126 = vmatpush1.bf16.msra.mxu0 0
    %127 = vmatprep.subr.bf16.mxu0 0
    %128 = vmatpush1.bf16.msra.mxu0 0
    %129 = vmatprep.subr.bf16.mxu0 0
    %130 = vmatpush1.bf16.msra.mxu0 0
    %131 = vmatprep.subr.bf16.mxu0 0
    %132 = vmatpush1.bf16.msra.mxu0 0
    %133 = vmatprep.subr.bf16.mxu0 0
    %134 = vmatpush1.bf16.msra.mxu0 0
    %135 = vmatprep.subr.bf16.mxu0 0
    %136 = vmatpush1.bf16.msra.mxu0 0
    %137 = vmatprep.mubr.bf16.mxu0 0
    %138 = vmatmul.mubr.bf16.gmra.mrb[0].mxu0 %v103
    %v139 = vpop.f32.mrb[0].mxu0
    %v140 = vadd.f32 %v87, %v139
    %v141 = vpop.f32.mrb[0].mxu0
    %v142 = vpop.f32.mrb[0].mxu0
    %v143 = vpop.f32.mrb[0].mxu0
    %144 = vdwg.mxu0
    %v145 = vmax.f32 %v140, 0.0
    %v146 = vpack.c.bf16 %v145, %v145
    %v148 = vlaneseq
    %v149 = vshrl.u32 %v148, 7
    %v150 = vsub.s32 0, %v149
    %v151 = vrot.slane %v63, %v150
    %v169 = vunpack.c.l.b16 %v47
    %v170 = vunpack.c.l.b16 %v48
    %v171 = vunpack.c.l.b16 %v49
    %v172 = vunpack.c.l.b16 %v50
    %v173 = vunpack.c.l.b16 %v51
    %v174 = vunpack.c.l.b16 %v52
    %v175 = vunpack.c.l.b16 %v53
    %v176 = vunpack.c.l.b16 %v54
    %v177 = vunpack.c.l.b16 %v55
    %v178 = vunpack.c.l.b16 %v56
    %v179 = vunpack.c.l.b16 %v57
    %v180 = vunpack.c.l.b16 %v58
    %v181 = vunpack.c.l.b16 %v59
    %v182 = vunpack.c.l.b16 %v60
    %v183 = vunpack.c.l.b16 %v61
    %v184 = vunpack.c.l.b16 %v62
    %v185 = vpack.c.b16 %v170, %v169
    %v186 = vpack.c.b16 %v172, %v171
    %v187 = vpack.c.b16 %v174, %v173
    %v188 = vpack.c.b16 %v176, %v175
    %v189 = vpack.c.b16 %v178, %v177
    %v190 = vpack.c.b16 %v180, %v179
    %v191 = vpack.c.b16 %v182, %v181
    %v192 = vpack.c.b16 %v184, %v183
    %201 = vmatprep.subr.bf16.mxu0 0
    %202 = vmatpush1.bf16.msra.mxu0 %v185
    %203 = vmatprep.subr.bf16.mxu0 0
    %204 = vmatpush1.bf16.msra.mxu0 %v186
    %205 = vmatprep.subr.bf16.mxu0 0
    %206 = vmatpush1.bf16.msra.mxu0 %v187
    %207 = vmatprep.subr.bf16.mxu0 0
    %208 = vmatpush1.bf16.msra.mxu0 %v188
    %209 = vmatprep.subr.bf16.mxu0 0
    %210 = vmatpush1.bf16.msra.mxu0 %v189
    %211 = vmatprep.subr.bf16.mxu0 0
    %212 = vmatpush1.bf16.msra.mxu0 %v190
    %213 = vmatprep.subr.bf16.mxu0 0
    %214 = vmatpush1.bf16.msra.mxu0 %v191
    %215 = vmatprep.subr.bf16.mxu0 0
    %216 = vmatpush1.bf16.msra.mxu0 %v192
    %217 = vmatprep.subr.bf16.mxu0 0
    %218 = vmatpush1.bf16.msra.mxu0 0
    %219 = vmatprep.subr.bf16.mxu0 0
    %220 = vmatpush1.bf16.msra.mxu0 0
    %221 = vmatprep.subr.bf16.mxu0 0
    %222 = vmatpush1.bf16.msra.mxu0 0
    %223 = vmatprep.subr.bf16.mxu0 0
    %224 = vmatpush1.bf16.msra.mxu0 0
    %225 = vmatprep.subr.bf16.mxu0 0
    %226 = vmatpush1.bf16.msra.mxu0 0
    %227 = vmatprep.subr.bf16.mxu0 0
    %228 = vmatpush1.bf16.msra.mxu0 0
    %229 = vmatprep.subr.bf16.mxu0 0
    %230 = vmatpush1.bf16.msra.mxu0 0
    %231 = vmatprep.subr.bf16.mxu0 0
    %232 = vmatpush1.bf16.msra.mxu0 0
    %233 = vmatprep.mubr.bf16.mxu0 0
    %234 = vmatmul.mubr.bf16.gmra.mrb[0].mxu0 %v146
    %v235 = vpop.f32.mrb[0].mxu0
    %v236 = vadd.f32 %v151, %v235
    %v237 = vpop.f32.mrb[0].mxu0
    %v238 = vpop.f32.mrb[0].mxu0
    %v239 = vpop.f32.mrb[0].mxu0
    %240 = vdwg.mxu0
    %v241 = vmax.f32 %v236, 0.0
    %v242 = vpack.c.bf16 %v241, %v241
    %v244 = vlaneseq
    %v245 = vshrl.u32 %v244, 7
    %v246 = vsub.s32 0, %v245
    %v247 = vrot.slane %v80, %v246
    %v265 = vunpack.c.l.b16 %v64
    %v266 = vunpack.c.l.b16 %v65
    %v267 = vunpack.c.l.b16 %v66
    %v268 = vunpack.c.l.b16 %v67
    %v269 = vunpack.c.l.b16 %v68
    %v270 = vunpack.c.l.b16 %v69
    %v271 = vunpack.c.l.b16 %v70
    %v272 = vunpack.c.l.b16 %v71
    %v273 = vunpack.c.l.b16 %v72
    %v274 = vunpack.c.l.b16 %v73
    %v275 = vunpack.c.l.b16 %v74
    %v276 = vunpack.c.l.b16 %v75
    %v277 = vunpack.c.l.b16 %v76
    %v278 = vunpack.c.l.b16 %v77
    %v279 = vunpack.c.l.b16 %v78
    %v280 = vunpack.c.l.b16 %v79
    %v281 = vpack.c.b16 %v266, %v265
    %v282 = vpack.c.b16 %v268, %v267
    %v283 = vpack.c.b16 %v270, %v269
    %v284 = vpack.c.b16 %v272, %v271
    %v285 = vpack.c.b16 %v274, %v273
    %v286 = vpack.c.b16 %v276, %v275
    %v287 = vpack.c.b16 %v278, %v277
    %v288 = vpack.c.b16 %v280, %v279
    %297 = vmatprep.subr.bf16.mxu0 0
    %298 = vmatpush1.bf16.msra.mxu0 %v281
    %299 = vmatprep.subr.bf16.mxu0 0
    %300 = vmatpush1.bf16.msra.mxu0 %v282
    %301 = vmatprep.subr.bf16.mxu0 0
    %302 = vmatpush1.bf16.msra.mxu0 %v283
    %303 = vmatprep.subr.bf16.mxu0 0
    %304 = vmatpush1.bf16.msra.mxu0 %v284
    %305 = vmatprep.subr.bf16.mxu0 0
    %306 = vmatpush1.bf16.msra.mxu0 %v285
    %307 = vmatprep.subr.bf16.mxu0 0
    %308 = vmatpush1.bf16.msra.mxu0 %v286
    %309 = vmatprep.subr.bf16.mxu0 0
    %310 = vmatpush1.bf16.msra.mxu0 %v287
    %311 = vmatprep.subr.bf16.mxu0 0
    %312 = vmatpush1.bf16.msra.mxu0 %v288
    %313 = vmatprep.subr.bf16.mxu0 0
    %314 = vmatpush1.bf16.msra.mxu0 0
    %315 = vmatprep.subr.bf16.mxu0 0
    %316 = vmatpush1.bf16.msra.mxu0 0
    %317 = vmatprep.subr.bf16.mxu0 0
    %318 = vmatpush1.bf16.msra.mxu0 0
    %319 = vmatprep.subr.bf16.mxu0 0
    %320 = vmatpush1.bf16.msra.mxu0 0
    %321 = vmatprep.subr.bf16.mxu0 0
    %322 = vmatpush1.bf16.msra.mxu0 0
    %323 = vmatprep.subr.bf16.mxu0 0
    %324 = vmatpush1.bf16.msra.mxu0 0
    %325 = vmatprep.subr.bf16.mxu0 0
    %326 = vmatpush1.bf16.msra.mxu0 0
    %327 = vmatprep.subr.bf16.mxu0 0
    %328 = vmatpush1.bf16.msra.mxu0 0
    %329 = vmatprep.mubr.bf16.mxu0 0
    %330 = vmatmul.mubr.bf16.gmra.mrb[0].mxu0 %v242
    %v331 = vpop.f32.mrb[0].mxu0
    %v332 = vadd.f32 %v247, %v331
    %v333 = vpop.f32.mrb[0].mxu0
    %v334 = vpop.f32.mrb[0].mxu0
    %v335 = vpop.f32.mrb[0].mxu0
    %336 = vdwg.mxu0
    %vm337 = vcmask 64512
    %338 = vst.msk [vmem:[#allocation5] sm:$0xff] %vm337, %v332
    // Predicated region
    $region34: #{tpu_custom_call.1} parent=1 // pred_check
      _
    $region35: #{tpu_custom_call.1} parent=1 // pred_check_branch
      %340 = sbr.rel (0) target = $region37
    $region36: #{tpu_custom_call.1} parent=1 // pred_region
      %s342 = ssub.s32 128, 128
      %343 = vsyncadd [#allocation4], %s342
      %s345 = sshll.u32 [#allocation5], 4
      %s346 = int_to_ptr.vmem [resolvable:$true] %s345
      %348 = dma.vmem_to_hbm [thread:$0]  %s346, 128, %s7, [#allocation4]
    $region37: #{tpu_custom_call.1} parent=1 // pred_fallthru
      _
    // Predicated region
    $region38: #{tpu_custom_call.1} parent=1 // pred_check
      _
    $region39: #{tpu_custom_call.1} parent=1 // pred_check_branch
      %350 = sbr.rel (0) target = $region41
    $region40: #{tpu_custom_call.1} parent=1 // pred_region
      %351 = dma.done [#allocation4], 128
    $region41: #{tpu_custom_call.1} parent=1 // pred_fallthru
      _
    %352 = vsyncpa [#allocation3], 1
    %353 = vsyncpa [#allocation4], 1

</llo_original>
